<compile_context>
chip_gen: v6e
topology: v6e:2x2x1
jax: 0.10.0
libtpu: 0.0.40
codegen_flags: <defaults>
</compile_context>

<pallas_src>
import functools
import math

import jax
import jax.numpy as jnp
from jax.experimental import pallas as pl
from jax.experimental.pallas import tpu as pltpu


def _round_up(v, m):
    return ((v + m - 1) // m) * m


# ----------------------------------------------------------------------------
# Tiled matmul (1x1-conv-as-matmul) kernel: bf16 MXU inputs, f32 accumulation.
# Inputs are cast to bf16 INSIDE the kernel (no extra XLA cast pass over HBM).
# ----------------------------------------------------------------------------

def _mm_kernel(x_ref, w_ref, o_ref, acc_ref):
    @pl.when(pl.program_id(2) == 0)
    def _():
        acc_ref[...] = jnp.zeros_like(acc_ref)

    acc_ref[...] += jnp.dot(x_ref[...].astype(jnp.bfloat16),
                            w_ref[...].astype(jnp.bfloat16),
                            preferred_element_type=jnp.float32)

    @pl.when(pl.program_id(2) == pl.num_programs(2) - 1)
    def _():
        o_ref[...] = acc_ref[...].astype(o_ref.dtype)


def matmul1x1(x, w, out_dtype=jnp.float32, tm=512, tn=512, tk=512):
    """x [M, Cin] @ w [Cin, Cout], f32 accumulation, in-kernel bf16 cast."""
    M, K = x.shape
    Kw, N = w.shape
    assert K == Kw
    # Small dims use a full-extent block (satisfies the (8,128) rule); padding only
    # triggers when a tile does not evenly divide (zero K-padding is exact).
    tm_e = tm if M > tm else M
    tn_e = tn if N > tn else N
    tk_e = tk if K > tk else K
    Mp, Np, Kp = _round_up(M, tm_e), _round_up(N, tn_e), _round_up(K, tk_e)
    xp = x if (Mp, Kp) == (M, K) else jnp.pad(x, ((0, Mp - M), (0, Kp - K)))
    wp = w if (Kp, Np) == (K, N) else jnp.pad(w, ((0, Kp - K), (0, Np - N)))

    out = pl.pallas_call(
        _mm_kernel,
        out_shape=jax.ShapeDtypeStruct((Mp, Np), out_dtype),
        grid=(Mp // tm_e, Np // tn_e, Kp // tk_e),
        in_specs=[pl.BlockSpec((tm_e, tk_e), lambda i, j, k: (i, k)),
                  pl.BlockSpec((tk_e, tn_e), lambda i, j, k: (k, j))],
        out_specs=pl.BlockSpec((tm_e, tn_e), lambda i, j, k: (i, j)),
        scratch_shapes=[pltpu.VMEM((tm_e, tn_e), jnp.float32)],
        compiler_params=pltpu.CompilerParams(
            dimension_semantics=("parallel", "parallel", "arbitrary"),
            # 512-tile working set is ~7 MiB; 32 MiB is safe on v7x (64 MiB physical)
            # and leaves headroom for double buffering on v5e/v6e.
            vmem_limit_bytes=32 * 1024 * 1024),
        cost_estimate=pl.CostEstimate(
            flops=2 * Mp * Np * Kp, transcendentals=0,
            bytes_accessed=Mp * Kp * x.dtype.itemsize
                           + Kp * Np * w.dtype.itemsize
                           + Mp * Np * jnp.dtype(out_dtype).itemsize),
    )(xp, wp)
    if (Mp, Np) != (M, N):
        out = out[:M, :N]
    return out


# ----------------------------------------------------------------------------
# Stage-4 attention: fused QK^T + softmax for BOTH blocks, with the head-weighted
# reduction (needed by attn_pred) emitted as an extra output so the (B,H,N,N)
# stacks are never re-read from HBM.  Head split is done via static lane slices
# of the fused [q0|k0|q1|k1] projection (no XLA head transpose).
# ----------------------------------------------------------------------------

def _attn_kernel(w_ref, q0_ref, k0_ref, q1_ref, k1_ref, a1_ref, a2_ref, ws_ref,
                 *, num_heads, scale):
    d4 = q0_ref.shape[2]
    dh = d4 // num_heads
    wsum = None
    for st, (q_r, k_r, a_r) in enumerate(((q0_ref, k0_ref, a1_ref),
                                          (q1_ref, k1_ref, a2_ref))):
        q = q_r[0]                                    # (tq, d4) bf16
        k = k_r[0]                                    # (N,  d4) bf16
        for h in range(num_heads):
            qh = q[:, h * dh:(h + 1) * dh]
            kh = k[:, h * dh:(h + 1) * dh]
            s = jax.lax.dot_general(qh, kh, (((1,), (1,)), ((), ())),
                                    preferred_element_type=jnp.float32) * scale
            s = s - jnp.max(s, axis=-1, keepdims=True)
            e = jnp.exp(s)
            p = e / jnp.sum(e, axis=-1, keepdims=True)   # exact softmax (parity)
            a_r[0, h] = p
            contrib = w_ref[st, h] * p                   # scalar from SMEM
            wsum = contrib if wsum is None else wsum + contrib
    ws_ref[0] = wsum


def attn_scores_fused(qk, w_heads, scale, num_heads):
    """qk: (B, N, 4*d4) bf16 with channels [q0|k0|q1|k1]; w_heads: (2, H) f32 SMEM.

    Returns attn1 (B,H,N,N) f32, attn2 (B,H,N,N) f32 and the head-weighted sum
    wsum (B,N,N) f32 = sum_h w1_h*attn1_h + sum_h w2_h*attn2_h.
    """
    B, N, D4 = qk.shape
    d4 = D4 // 4
    H = num_heads
    tq = N if (N <= 256 or N % 256 != 0) else 256      # bounds VMEM at large N
    nq = N // tq

    kernel = functools.partial(_attn_kernel, num_heads=num_heads, scale=scale)
    return pl.pallas_call(
        kernel,
        out_shape=(jax.ShapeDtypeStruct((B, H, N, N), jnp.float32),
                   jax.ShapeDtypeStruct((B, H, N, N), jnp.float32),
                   jax.ShapeDtypeStruct((B, N, N), jnp.float32)),
        grid=(B, nq),
        in_specs=[pl.BlockSpec(memory_space=pltpu.MemorySpace.SMEM),
                  pl.BlockSpec((1, tq, d4), lambda b, qi: (b, qi, 0)),   # q0 rows
                  pl.BlockSpec((1, N, d4), lambda b, qi: (b, 0, 1)),     # k0 all
                  pl.BlockSpec((1, tq, d4), lambda b, qi: (b, qi, 2)),   # q1 rows
                  pl.BlockSpec((1, N, d4), lambda b, qi: (b, 0, 3))],    # k1 all
        out_specs=(pl.BlockSpec((1, H, tq, N), lambda b, qi: (b, 0, qi, 0)),
                   pl.BlockSpec((1, H, tq, N), lambda b, qi: (b, 0, qi, 0)),
                   pl.BlockSpec((1, tq, N), lambda b, qi: (b, qi, 0))),
        compiler_params=pltpu.CompilerParams(
            dimension_semantics=("parallel", "parallel")),
    )(w_heads, qk, qk, qk, qk)


# ----------------------------------------------------------------------------
# attn_pred: symmetrize the (already head-reduced) projection, add bias, sigmoid.
# conv1x1(a + a^T) == conv1x1(a) + conv1x1(a)^T by linearity, so one transpose.
# ----------------------------------------------------------------------------

def _attn_pred_kernel(b_ref, ws_ref, o_ref):
    p = ws_ref[0]                                      # (N, N)
    sym = p + jnp.swapaxes(p, 0, 1)
    o_ref[0] = jax.nn.sigmoid(sym + b_ref[0])


def attn_pred_pallas(wsum, bias):
    B, N, _ = wsum.shape
    b_smem = bias.reshape(1).astype(jnp.float32)
    return pl.pallas_call(
        _attn_pred_kernel,
        out_shape=jax.ShapeDtypeStruct((B, N, N), jnp.float32),
        grid=(B,),
        in_specs=[pl.BlockSpec(memory_space=pltpu.MemorySpace.SMEM),
                  pl.BlockSpec((1, N, N), lambda b: (b, 0, 0))],
        out_specs=pl.BlockSpec((1, N, N), lambda b: (b, 0, 0)),
        compiler_params=pltpu.CompilerParams(dimension_semantics=("parallel",)),
    )(b_smem, wsum)


# ----------------------------------------------------------------------------
# Fused SegFormerHead decode: nearest-upsample + concat + fuse conv (ReLU) + pred
# conv, one kernel, an 8-fine-row block per grid step.  Replication matrices are
# precomputed 0/1 bf16 constants; all reshapes live in glue as free row-major views.
# ----------------------------------------------------------------------------

def _fuse_pred_kernel(m1_ref, m2_ref, m3_ref, m4_ref, r2_ref, r3_ref, r4_ref,
                      wf_ref, bf_ref, wp_ref, bp_ref, o_ref):
    E = m1_ref.shape[3]
    Ef = wf_ref.shape[1]
    F = o_ref.shape[2]
    acc = jnp.zeros((F, Ef), jnp.float32)
    # concat channel order c4, c3, c2, c1 (matches torch.cat([_c4,_c3,_c2,_c1], dim=1))
    order = ((m4_ref, r4_ref), (m3_ref, r3_ref), (m2_ref, r2_ref), (m1_ref, None))
    for idx, (mref, rref) in enumerate(order):
        cf = mref[0, 0]                                     # (rb_i*w_i, E) bf16
        if rref is not None:
            # exact nearest 2D upsample of bf16 values via a 0/1 bf16 MXU matmul
            cf = jnp.dot(rref[...], cf,
                         preferred_element_type=jnp.float32).astype(jnp.bfloat16)
        acc = acc + jnp.dot(cf, wf_ref[idx * E:(idx + 1) * E, :],
                            preferred_element_type=jnp.float32)
    fused = jnp.maximum(acc + bf_ref[...], 0.0)             # fuse bias + ReLU
    seg = jnp.dot(fused.astype(jnp.bfloat16), wp_ref[...],
                  preferred_element_type=jnp.float32) + bp_ref[...]
    o_ref[0, 0] = seg


def _make_rep(RB, W0, s):
    """0/1 matrix mapping a flattened (RB//s, W0//s) coarse block to (RB, W0) fine."""
    F = RB * W0
    fy = jnp.arange(F) // W0
    fx = jnp.arange(F) % W0
    src = (fy // s) * (W0 // s) + (fx // s)
    C = (RB // s) * (W0 // s)
    return (src[:, None] == jnp.arange(C)[None, :]).astype(jnp.bfloat16)


def fuse_pred_pallas(mlps_flat, shapes, fuse_w, fuse_b, pred_w, pred_b,
                     num_classes, H0, W0):
    """mlps_flat: 4 per-scale MLP outputs (B*h_i*w_i, E) bf16, fine -> coarse."""
    E = mlps_flat[0].shape[1]
    B = mlps_flat[0].shape[0] // (H0 * W0)
    RB = 8 if H0 % 8 == 0 else H0                      # LCM of the scale ratios
    nyb = H0 // RB
    F = RB * W0
    ncp = _round_up(num_classes, 32)                   # classes padded to 32 lanes only

    m_blocks, reps, in_specs = [], [], []
    for (h, w), m in zip(shapes, mlps_flat):
        s = H0 // h
        cw = (RB // s) * w
        # free row-major reshape: (B*h*w, E) -> (B, nyb, (RB//s)*w, E)
        m_blocks.append(m.reshape(B, nyb, cw, E))
        in_specs.append(pl.BlockSpec((1, 1, cw, E), lambda b, y: (b, y, 0, 0)))
        if s > 1:
            reps.append(_make_rep(RB, W0, s))
    assert len(reps) == 3, "expected scale ratios {1,2,4,8}"
    for r in reps:
        in_specs.append(pl.BlockSpec(r.shape, lambda b, y: (0, 0)))

    wf = fuse_w.astype(jnp.bfloat16)                   # (4E, E)
    bf = fuse_b.astype(jnp.float32).reshape(1, E)
    wp = jnp.zeros((E, ncp), jnp.bfloat16).at[:, :num_classes].set(
        pred_w.astype(jnp.bfloat16))
    bp = jnp.zeros((1, ncp), jnp.float32).at[:, :num_classes].set(
        pred_b.reshape(1, num_classes))
    in_specs += [pl.BlockSpec((4 * E, E), lambda b, y: (0, 0)),
                 pl.BlockSpec((1, E), lambda b, y: (0, 0)),
                 pl.BlockSpec((E, ncp), lambda b, y: (0, 0)),
                 pl.BlockSpec((1, ncp), lambda b, y: (0, 0))]

    out = pl.pallas_call(
        _fuse_pred_kernel,
        out_shape=jax.ShapeDtypeStruct((B, nyb, F, ncp), jnp.float32),
        grid=(B, nyb),
        in_specs=in_specs,
        out_specs=pl.BlockSpec((1, 1, F, ncp), lambda b, y: (b, y, 0, 0)),
        compiler_params=pltpu.CompilerParams(
            dimension_semantics=("parallel", "parallel"),
            vmem_limit_bytes=32 * 1024 * 1024),
    )(*m_blocks, *reps, wf, bf, wp, bp)
    return out.reshape(B, H0, W0, ncp)                 # free row-major reshape


# ----------------------------------------------------------------------------
# adaptive_avg_pool2d(1,1) + classifier conv: one batched matmul, single grid step.
# ----------------------------------------------------------------------------

def _cls_kernel(x_ref, w_ref, o_ref):
    pooled = jnp.mean(x_ref[...], axis=1)              # (B, C)
    o_ref[...] = jnp.dot(pooled, w_ref[...], preferred_element_type=jnp.float32)


def classify_pallas(x4_nhwc, w, num_classes):
    B, H, W, C = x4_nhwc.shape
    x = x4_nhwc.reshape(B, H * W, C)
    ncp = _round_up(num_classes, 32)
    wp = jnp.zeros((C, ncp), jnp.float32).at[:, :num_classes].set(w)
    out = pl.pallas_call(
        _cls_kernel,
        out_shape=jax.ShapeDtypeStruct((B, ncp), jnp.float32),
        grid=(1,),
        in_specs=[pl.BlockSpec((B, H * W, C), lambda i: (0, 0, 0)),
                  pl.BlockSpec((C, ncp), lambda i: (0, 0))],
        out_specs=pl.BlockSpec((B, ncp), lambda i: (0, 0)),
    )(x, wp)
    return out[:, :num_classes]


# ----------------------------------------------------------------------------
# Deterministic parameter construction (shapes implied by the module __init__)
# ----------------------------------------------------------------------------

def _init(key, shape, scale):
    return jax.random.normal(key, shape, dtype=jnp.float32) * scale


def make_params(key, num_classes=20, embedding_dim=256, in_chans=3,
                embed_dims=(64, 128, 256, 512)):
    keys = jax.random.split(key, 20)
    p = {}
    # encoder stand-in: per-stage patch-embed projections (1x1 conv weights)
    p["patch_w"] = [_init(keys[i], (in_chans, d), 1.0 / math.sqrt(in_chans))
                    for i, d in enumerate(embed_dims)]
    # encoder stand-in: two stage-4 attention blocks (q / k projections, 8 heads)
    d4 = embed_dims[3]
    p["wq"] = [_init(keys[4], (d4, d4), 1.0 / math.sqrt(d4)),
               _init(keys[5], (d4, d4), 1.0 / math.sqrt(d4))]
    p["wk"] = [_init(keys[6], (d4, d4), 1.0 / math.sqrt(d4)),
               _init(keys[7], (d4, d4), 1.0 / math.sqrt(d4))]
    # SegFormerHead: per-scale MLP, fuse conv (with bias), pred conv (with bias)
    p["mlp_w"] = [_init(keys[8 + i], (embed_dims[i], embedding_dim),
                        1.0 / math.sqrt(embed_dims[i])) for i in range(4)]
    p["fuse_w"] = _init(keys[12], (4 * embedding_dim, embedding_dim),
                        1.0 / math.sqrt(4 * embedding_dim))
    p["fuse_b"] = jnp.zeros((1, embedding_dim), jnp.float32)
    p["pred_w"] = _init(keys[13], (embedding_dim, num_classes),
                        1.0 / math.sqrt(embedding_dim))
    p["pred_b"] = jnp.zeros((1, num_classes), jnp.float32)
    # classifier: nn.Conv2d(512, 20, kernel_size=1, bias=False)
    p["cls_w"] = _init(keys[14], (d4, num_classes), 1.0 / math.sqrt(d4))
    # attn_proj: nn.Conv2d(16, 1, 1, bias=True), kaiming_normal(a=sqrt(5), fan_out)
    gain = math.sqrt(2.0 / (1.0 + 5.0))
    p["attn_proj_w"] = _init(keys[15], (1, 16), gain / math.sqrt(1.0))
    p["attn_proj_b"] = jnp.zeros((1, 1), jnp.float32)
    return p


# ----------------------------------------------------------------------------
# Forward pass
# ----------------------------------------------------------------------------

def _patch_embed(x_nchw, w, s):
    # K=3 projection is far too lane-sparse for the MXU; let XLA fuse the strided
    # pool + NCHW->NHWC transpose + 3 broadcast-MACs into one VPU pass.
    B, C, H, W = x_nchw.shape
    pooled = x_nchw.reshape(B, C, H // s, s, W // s, s).mean(axis=(3, 5))
    return jnp.einsum("bchw,cd->bhwd", pooled, w)


def encoder_forward(params, x_nchw, embed_dims=(64, 128, 256, 512),
                    strides=(4, 8, 16, 32), num_heads=8):
    # TODO(synk): MixVisionTransformer internals (overlapping patch embeds, Mix-FFN,
    # SR-attention blocks) are not given in the source; this stand-in produces feature
    # maps (channels 64/128/256/512 at strides 4/8/16/32) and stage-4 attention maps
    # (B, 8, N, N) with exactly the shapes the Wetr forward consumes.
    B = x_nchw.shape[0]
    feats = [_patch_embed(x_nchw, params["patch_w"][i], s)
             for i, s in enumerate(strides)]                # NHWC f32

    x4 = feats[3]
    h4, w4 = x4.shape[1], x4.shape[2]
    n4 = h4 * w4
    d4 = embed_dims[3]
    head_dim = d4 // num_heads
    tokens = x4.reshape(B * n4, d4)

    # One fused projection for q/k of both stage-4 blocks: tokens read from HBM once.
    wqk = jnp.concatenate([params["wq"][0], params["wk"][0],
                           params["wq"][1], params["wk"][1]], axis=1)   # (d4, 4*d4)
    qk = matmul1x1(tokens, wqk, out_dtype=jnp.bfloat16).reshape(B, n4, 4 * d4)

    w_heads = params["attn_proj_w"].reshape(2, num_heads).astype(jnp.float32)
    a1, a2, wsum = attn_scores_fused(qk, w_heads, 1.0 / math.sqrt(head_dim),
                                     num_heads)
    return feats, [a1, a2], wsum


def decoder_forward(params, feats_nhwc, num_classes=20):
    # SegFormerHead: per-scale linear -> resize to 1/4 -> concat -> fuse -> pred,
    # with resize/concat/fuse/pred fused into one Pallas kernel (8 fine rows / step).
    # TODO(synk): SegFormerHead body not provided; BatchNorm omitted and nearest
    # (instead of bilinear) upsampling is used.
    B, H0, W0, _ = feats_nhwc[0].shape
    mlps_flat, shapes = [], []
    for i, f in enumerate(feats_nhwc):
        _, h, w, c = f.shape
        mlps_flat.append(matmul1x1(f.reshape(B * h * w, c), params["mlp_w"][i],
                                   out_dtype=jnp.bfloat16))
        shapes.append((h, w))
    seg_pad = fuse_pred_pallas(mlps_flat, shapes, params["fuse_w"],
                               params["fuse_b"], params["pred_w"],
                               params["pred_b"], num_classes, H0, W0)
    seg = seg_pad[..., :num_classes]
    return jnp.transpose(seg, (0, 3, 1, 2))                 # NCHW like PyTorch


def wetr_forward(params, x_nchw, cam_only=False, num_classes=20):
    feats_nhwc, attns, attn_wsum = encoder_forward(params, x_nchw)
    feats_nchw = [jnp.transpose(f, (0, 3, 1, 2)) for f in feats_nhwc]   # _x1.._x4

    seg = decoder_forward(params, feats_nhwc, num_classes=num_classes)

    # cat(_attns[-2:]) -> symmetrize -> 1x1 conv -> sigmoid.  The head-weighted channel
    # reduction already happened inside the attention kernel (attn_wsum), so only the
    # cheap transpose+add+sigmoid on (B,N,N) remains.
    attn_pred = attn_pred_pallas(attn_wsum, params["attn_proj_b"])

    x4 = feats_nhwc[3]
    if cam_only:
        B, h, w, c = x4.shape
        cam = matmul1x1(x4.reshape(B * h * w, c), params["cls_w"])
        cam_s4 = jnp.transpose(cam.reshape(B, h, w, num_classes), (0, 3, 1, 2))
        return cam_s4, attn_pred

    cls_x4 = classify_pallas(x4, params["cls_w"], num_classes)   # pool + classifier
    return cls_x4, feats_nchw, seg, attns, attn_pred


# ----------------------------------------------------------------------------
# Demo
# ----------------------------------------------------------------------------

if __name__ == "__main__":
    key = jax.random.PRNGKey(0)
    kx, kp = jax.random.split(key)

    B, C, H, W = 2, 3, 64, 64                 # strides [4,8,16,32] -> x4 is 2x2
    x = jax.random.normal(kx, (B, C, H, W), dtype=jnp.float32)
    params = make_params(kp)

    cls_x4, feats, seg, attns, attn_pred = wetr_forward(params, x)
    jax.block_until_ready((cls_x4, seg, attn_pred, feats[3], attns[-1]))

    n4 = (H // 32) * (W // 32)
    assert cls_x4.shape == (B, 20)
    assert seg.shape == (B, 20, H // 4, W // 4)
    assert feats[3].shape == (B, 512, H // 32, W // 32)
    assert attns[-1].shape == (B, 8, n4, n4)
    assert attn_pred.shape == (B, n4, n4)
    print("KERNEL_OK")
</pallas_src>

<mosaic_0001>
module attributes {stable_mosaic.version = 11 : i64} {
  func.func @_mm_kernel(%arg0: i32, %arg1: i32, %arg2: i32, %arg3: memref<8x512xf32, #tpu.memory_space<vmem>>, %arg4: memref<512x512xf32, #tpu.memory_space<vmem>>, %arg5: memref<8x512xbf16, #tpu.memory_space<vmem>>, %arg6: memref<8x512xf32, #tpu.memory_space<vmem>>) attributes {dimension_semantics = [#tpu.dimension_semantics<parallel>, #tpu.dimension_semantics<parallel>, #tpu.dimension_semantics<arbitrary>], iteration_bounds = array<i64: 1, 4, 1>, scalar_prefetch = 0 : i64, scratch_operands = 1 : i64, tpu.core_type = #tpu.core_type<tc>, window_params = [{transform_indices = @transform_0, window_bounds = array<i64: 8, 512>}, {transform_indices = @transform_1, window_bounds = array<i64: 512, 512>}, {transform_indices = @transform_2, window_bounds = array<i64: 8, 512>}]} {
    %c0_i32 = arith.constant 0 : i32
    %0 = arith.cmpi eq, %arg2, %c0_i32 : i32
    %1 = arith.extui %0 : i1 to i32
    %c0_i32_0 = arith.constant 0 : i32
    %2 = arith.cmpi ne, %1, %c0_i32_0 : i32
    scf.if %2 {
      %cst_10 = arith.constant 0.000000e+00 : f32
      %14 = vector.broadcast %cst_10 : f32 to vector<8x512xf32>
      %c0_11 = arith.constant 0 : index
      %c0_12 = arith.constant 0 : index
      %15 = vector.load %arg6[%c0_11, %c0_12] : memref<8x512xf32, #tpu.memory_space<vmem>>, vector<8x512xf32>
      tpu.vector_store %arg6[%c0_11, %c0_12], %14 {strides = array<i32>} : memref<8x512xf32, #tpu.memory_space<vmem>>, vector<8x512xf32>,
    } else {
    }
    %c0 = arith.constant 0 : index
    %c0_1 = arith.constant 0 : index
    %3 = vector.load %arg6[%c0, %c0_1] : memref<8x512xf32, #tpu.memory_space<vmem>>, vector<8x512xf32>
    %c0_2 = arith.constant 0 : index
    %c0_3 = arith.constant 0 : index
    %4 = vector.load %arg3[%c0_2, %c0_3] : memref<8x512xf32, #tpu.memory_space<vmem>>, vector<8x512xf32>
    %5 = arith.truncf %4 : vector<8x512xf32> to vector<8x512xbf16>
    %c0_4 = arith.constant 0 : index
    %c0_5 = arith.constant 0 : index
    %6 = vector.load %arg4[%c0_4, %c0_5] : memref<512x512xf32, #tpu.memory_space<vmem>>, vector<512x512xf32>
    %7 = arith.truncf %6 : vector<512x512xf32> to vector<512x512xbf16>
    %cst = arith.constant dense<0.000000e+00> : vector<8x512xf32>
    %8 = tpu.matmul %5, %7, %cst {dimension_numbers = #tpu.dot_dimension_numbers<[1], [0], [0], [1], [0, 0, 1, 1], [], []>} : vector<8x512xbf16>, vector<512x512xbf16>, vector<8x512xf32> -> vector<8x512xf32>
    %9 = arith.addf %3, %8 : vector<8x512xf32>
    %c0_6 = arith.constant 0 : index
    %c0_7 = arith.constant 0 : index
    %10 = vector.load %arg6[%c0_6, %c0_7] : memref<8x512xf32, #tpu.memory_space<vmem>>, vector<8x512xf32>
    tpu.vector_store %arg6[%c0_6, %c0_7], %9 {strides = array<i32>} : memref<8x512xf32, #tpu.memory_space<vmem>>, vector<8x512xf32>,
    %c0_i32_8 = arith.constant 0 : i32
    %11 = arith.cmpi eq, %arg2, %c0_i32_8 : i32
    %12 = arith.extui %11 : i1 to i32
    %c0_i32_9 = arith.constant 0 : i32
    %13 = arith.cmpi ne, %12, %c0_i32_9 : i32
    scf.if %13 {
      %c0_10 = arith.constant 0 : index
      %c0_11 = arith.constant 0 : index
      %14 = vector.load %arg6[%c0_10, %c0_11] : memref<8x512xf32, #tpu.memory_space<vmem>>, vector<8x512xf32>
      %15 = arith.truncf %14 : vector<8x512xf32> to vector<8x512xbf16>
      %c0_12 = arith.constant 0 : index
      %c0_13 = arith.constant 0 : index
      %16 = vector.load %arg5[%c0_12, %c0_13] : memref<8x512xbf16, #tpu.memory_space<vmem>>, vector<8x512xbf16>
      tpu.vector_store %arg5[%c0_12, %c0_13], %15 {strides = array<i32>} : memref<8x512xbf16, #tpu.memory_space<vmem>>, vector<8x512xbf16>,
    } else {
    }
    return
  }
  func.func @transform_0(%arg0: i32, %arg1: i32, %arg2: i32) -> (i32, i32) {
    %c0_i32 = arith.constant 0 : i32
    return %arg0, %arg2 : i32, i32
  }
  func.func @transform_1(%arg0: i32, %arg1: i32, %arg2: i32) -> (i32, i32) {
    %c0_i32 = arith.constant 0 : i32
    return %arg2, %arg1 : i32, i32
  }
  func.func @transform_2(%arg0: i32, %arg1: i32, %arg2: i32) -> (i32, i32) {
    %c0_i32 = arith.constant 0 : i32
    return %arg0, %arg1 : i32, i32
  }
}

</mosaic_0001>

<llo_original>
// kernel: tpu_custom_call.1
$region0: #{tpu_custom_call.1}
  #allocation0 [shape = 'u32[]', space=smem, size = 0x4, offset = 0x4, fixed_abs, tag = 'smem constant byte address 0x4 - core index']
  #allocation1 [shape = 'u32[144,128]{1,0:T(1,128)}', space=vmem, size = 0x12000, scoped, tag = 'internal scratch']
  #allocation2 [shape = 'f32[8,512]{1,0:T(8,128)}', space=vmem, size = 0x4000, scoped, tag = 'scratch operand']
  %s0 = inlined_call_operand.hbm [shape: f32[8,512], index: 0, kind: input, shape index: {}]
  %s1 = inlined_call_operand.hbm [shape: f32[512,2048], index: 1, kind: input, shape index: {}]
  %s2 = inlined_call_operand.hbm [shape: bf16[8,2048], index: 2, kind: output, shape index: {}]
  %s3 = sld [smem:[#allocation0]]
  $region57: #{tpu_custom_call.1} parent=0
    _
  %s5 = ssub.s32 1, %s3
  %s6 = scalar_select 0, %s5, %s3
  $region1: #{tpu_custom_call.1} parent=0
    #allocation3 [shape = 'u8[16384]{0}', space=vmem, size = 0x4000, scoped, tag = 'input window, operand 0, single buffered']
    #allocation4 [shape = 's32[2]{0}', space=sflag, size = 0x8, scoped, tag = 'scoped memory for tpu_custom_call.1']
    #allocation5 [shape = 's32[2]{0}', space=sflag, size = 0x8, scoped, tag = 'scoped memory for tpu_custom_call.1']
    #allocation6 [shape = 'u8[2097152]{0}', space=vmem, size = 0x200000, scoped, tag = 'input window, operand 1']
    #allocation7 [shape = 's32[2]{0}', space=sflag, size = 0x8, scoped, tag = 'scoped memory for tpu_custom_call.1']
    #allocation8 [shape = 'u8[16384]{0}', space=vmem, size = 0x4000, scoped, tag = 'output window, operand 0']
    %7 = vsyncpa [#allocation4], 0
    %8 = vsyncpa [#allocation7], 0
    %s9 = scalar_lea.sflag [#allocation7], 1
    %10 = vsyncpa %s9, 0
    %11 = vsyncpa [#allocation5], 0
    %s12 = scalar_lea.sflag [#allocation5], 1
    %13 = vsyncpa %s12, 0
    loop: start=0, step=1, limit=6
    $region2: #{tpu_custom_call.1} parent=1 // loop_pre_header
      _
    $region3: #{tpu_custom_call.1} parent=1 // loop_header
      %s15 = sphi 0, %s19
      %p16 = scmp.ge.s32.totalorder %s15, 6
      %s22 = sphi 0, %s41
      %s23 = sphi 0, %s37
      %s24 = sphi 0, %s33
      %s25 = sphi 0, %s22
      %s26 = sphi 0, %s23
      %s27 = sphi 0, %s24
      %s28 = sphi 0, %s25
      %s29 = sphi 0, %s26
      %s30 = sphi 0, %s27
      %s46 = sphi 0, %s48
      %s49 = sphi 0, %s46
      %s50 = sphi 0, %s49
      %s66 = sphi 0, %s50
      %s74 = sphi 0, %s76
      %s77 = sphi 0, %s74
      %s78 = sphi 0, %s77
      %s94 = sphi 0, %s78
      %s102 = sphi 0, %s104
      %s105 = sphi 0, %s102
      %s106 = sphi 0, %s105
      %s122 = sphi 0, %s106
    $region4: #{tpu_custom_call.1} parent=1 // loop_header_branch
      %18 = sbr.rel (%p16) target = $region8
    $region5: #{tpu_custom_call.1} parent=1 // loop_body
      %s20 = ssub.s32 %s15, 1
      %s21 = ssub.s32 %s15, 2
      %s31 = sadd.s32 1, %s24
      %p32 = scmp.ge.s32.totalorder %s31, 1
      %s33 = scalar_select %p32, 0, %s31
      %s34 = sadd.s32 1, %s23
      %s35 = scalar_select %p32, %s34, %s23
      %p36 = scmp.ge.s32.totalorder %s35, 4
      %s37 = scalar_select %p36, 0, %s35
      %s38 = sadd.s32 1, %s22
      %s39 = scalar_select %p36, %s38, %s22
      %p40 = scmp.ge.s32.totalorder %s39, 1
      %s41 = scalar_select %p40, 0, %s39
      %s42 = ssub.s32 %s22, %s41
      %s43 = ssub.s32 %s24, %s33
      %s44 = sor.u32 %s42, %s43
      %p45 = scmp.eq.s32.totalorder %s44, 0
      %s47 = sadd.s32 %s46, 1
      %s48 = scalar_select %p45, %s46, %s47
      %p51 = pneg %p45
      %p52 = scmp.eq.s32.totalorder %s15, 3
      %p53 = por %p51, %p52
      %p54 = scmp.ne.s32.totalorder %s46, %s49
      %p55 = scmp.eq.s32.totalorder %s15, 0
      %p56 = por %p54, %p55
      %p57 = scmp.ne.s32.totalorder %s46, %s49
      %p58 = scmp.eq.s32.totalorder %s20, 3
      %p59 = por %p57, %p58
      %p60 = scmp.ne.s32.totalorder %s49, %s50
      %p61 = scmp.eq.s32.totalorder %s20, 0
      %p62 = por %p60, %p61
      %p63 = scmp.ne.s32.totalorder %s49, %s50
      %p64 = scmp.eq.s32.totalorder %s21, 3
      %p65 = por %p63, %p64
      %p67 = scmp.ne.s32.totalorder %s50, %s66
      %p68 = scmp.eq.s32.totalorder %s21, 0
      %p69 = por %p67, %p68
      %s70 = ssub.s32 %s24, %s33
      %s71 = ssub.s32 %s23, %s37
      %s72 = sor.u32 %s70, %s71
      %p73 = scmp.eq.s32.totalorder %s72, 0
      %s75 = sadd.s32 %s74, 1
      %s76 = scalar_select %p73, %s74, %s75
      %p79 = pneg %p73
      %p80 = scmp.eq.s32.totalorder %s15, 3
      %p81 = por %p79, %p80
      %p82 = scmp.ne.s32.totalorder %s74, %s77
      %p83 = scmp.eq.s32.totalorder %s15, 0
      %p84 = por %p82, %p83
      %p85 = scmp.ne.s32.totalorder %s74, %s77
      %p86 = scmp.eq.s32.totalorder %s20, 3
      %p87 = por %p85, %p86
      %p88 = scmp.ne.s32.totalorder %s77, %s78
      %p89 = scmp.eq.s32.totalorder %s20, 0
      %p90 = por %p88, %p89
      %p91 = scmp.ne.s32.totalorder %s77, %s78
      %p92 = scmp.eq.s32.totalorder %s21, 3
      %p93 = por %p91, %p92
      %p95 = scmp.ne.s32.totalorder %s78, %s94
      %p96 = scmp.eq.s32.totalorder %s21, 0
      %p97 = por %p95, %p96
      %s98 = ssub.s32 %s22, %s41
      %s99 = ssub.s32 %s23, %s37
      %s100 = sor.u32 %s98, %s99
      %p101 = scmp.eq.s32.totalorder %s100, 0
      %s103 = sadd.s32 %s102, 1
      %s104 = scalar_select %p101, %s102, %s103
      %p107 = pneg %p101
      %p108 = scmp.eq.s32.totalorder %s15, 3
      %p109 = por %p107, %p108
      %p110 = scmp.ne.s32.totalorder %s102, %s105
      %p111 = scmp.eq.s32.totalorder %s15, 0
      %p112 = por %p110, %p111
      %p113 = scmp.ne.s32.totalorder %s102, %s105
      %p114 = scmp.eq.s32.totalorder %s20, 3
      %p115 = por %p113, %p114
      %p116 = scmp.ne.s32.totalorder %s105, %s106
      %p117 = scmp.eq.s32.totalorder %s20, 0
      %p118 = por %p116, %p117
      %p119 = scmp.ne.s32.totalorder %s105, %s106
      %p120 = scmp.eq.s32.totalorder %s21, 3
      %p121 = por %p119, %p120
      %p123 = scmp.ne.s32.totalorder %s106, %s122
      %p124 = scmp.eq.s32.totalorder %s21, 0
      %p125 = por %p123, %p124
      %p126 = scmp.le.s32.totalorder 1, %s15
      %p127 = scmp.lt.s32.totalorder %s15, 5
      %p128 = pnand %p126, %p127
      %p129 = pneg %p128
      // Predicated region
      $region9: #{tpu_custom_call.1} parent=5 // pred_check
        _
      $region10: #{tpu_custom_call.1} parent=5 // pred_check_branch
        %131 = sbr.rel (%p128) target = $region12
      $region11: #{tpu_custom_call.1} parent=5 // pred_region
        %s132 = ssub.s32 %s15, 1
        // Predicated region
        $region13: #{tpu_custom_call.1} parent=11 // pred_check
          %p133 = pneg %p62
        $region14: #{tpu_custom_call.1} parent=11 // pred_check_branch
          %135 = sbr.rel (%p133) target = $region16
        $region15: #{tpu_custom_call.1} parent=11 // pred_region
          %s136 = smul.u32 4, %s27
          %s138 = ssub.s32 512, 512
          %139 = vsyncadd [#allocation4], %s138
          %s140 = smul.addr %s25, 4
          %s141 = sadd.s32 %s136, %s140
          %s142 = smul.addr %s141, 128
          %s143 = scalar_lea.hbm %s0, %s142
          %s145 = sshll.u32 [#allocation3], 4
          %s146 = int_to_ptr.vmem [resolvable:$true] %s145
          %148 = dma.hbm_to_vmem [thread:$0]  %s143, 512, %s146, [#allocation4]
        $region16: #{tpu_custom_call.1} parent=11 // pred_fallthru
          _
      $region12: #{tpu_custom_call.1} parent=5 // pred_fallthru
        _
      %p149 = scmp.lt.s32.totalorder %s15, 4
      // Predicated region
      $region17: #{tpu_custom_call.1} parent=5 // pred_check
        %p150 = pneg %p149
      $region18: #{tpu_custom_call.1} parent=5 // pred_check_branch
        %152 = sbr.rel (%p150) target = $region20
      $region19: #{tpu_custom_call.1} parent=5 // pred_region
        // Predicated region
        $region21: #{tpu_custom_call.1} parent=19 // pred_check
          %p153 = pneg %p84
        $region22: #{tpu_custom_call.1} parent=19 // pred_check_branch
          %155 = sbr.rel (%p153) target = $region24
        $region23: #{tpu_custom_call.1} parent=19 // pred_region
          %s156 = sand.u32 %s74, 1
          %s157 = scalar_lea.sflag [#allocation7], %s156
          %s158 = sand.u32 %s74, 1
          %s159 = smul.addr %s158, 2048
          %s160 = scalar_lea.vmem [#allocation6], %s159
          %s161 = smul.u32 64, %s24
          %s162 = smul.u32 4, %s23
          %s164 = ssub.s32 32768, 32768
          %165 = vsyncadd %s157, %s164
          %s166 = smul.addr %s161, 16
          %s167 = sadd.s32 %s162, %s166
          %s168 = smul.addr %s167, 128
          %s169 = scalar_lea.hbm %s1, %s168
          %s170 = sshll.u32 %s160, 4
          %s171 = int_to_ptr.vmem [resolvable:$true] %s170
          %176 = dma.hbm_to_vmem [thread:$0]  %s169, 32768, %s171, %s157, 2048, 512, 32
        $region24: #{tpu_custom_call.1} parent=19 // pred_fallthru
          _
      $region20: #{tpu_custom_call.1} parent=5 // pred_fallthru
        _
      %p177 = scmp.le.s32.totalorder 1, %s15
      %p178 = scmp.lt.s32.totalorder %s15, 5
      %p179 = pnand %p177, %p178
      %p180 = pneg %p179
      // Predicated region
      $region25: #{tpu_custom_call.1} parent=5 // pred_check
        _
      $region26: #{tpu_custom_call.1} parent=5 // pred_check_branch
        %182 = sbr.rel (%p179) target = $region28
      $region27: #{tpu_custom_call.1} parent=5 // pred_region
        %s183 = ssub.s32 %s15, 1
        // Predicated region
        $region29: #{tpu_custom_call.1} parent=27 // pred_check
          %p184 = pneg %p62
        $region30: #{tpu_custom_call.1} parent=27 // pred_check_branch
          %186 = sbr.rel (%p184) target = $region32
        $region31: #{tpu_custom_call.1} parent=27 // pred_region
          %187 = dma.done [#allocation4], 512
        $region32: #{tpu_custom_call.1} parent=27 // pred_fallthru
          _
        %s188 = sand.u32 %s77, 1
        %s189 = scalar_lea.sflag [#allocation7], %s188
        %s190 = sand.u32 %s77, 1
        %s191 = smul.addr %s190, 2048
        %s192 = scalar_lea.vmem [#allocation6], %s191
        // Predicated region
        $region33: #{tpu_custom_call.1} parent=27 // pred_check
          %p193 = pneg %p90
        $region34: #{tpu_custom_call.1} parent=27 // pred_check_branch
          %195 = sbr.rel (%p193) target = $region36
        $region35: #{tpu_custom_call.1} parent=27 // pred_region
          %196 = dma.done %s189, 32768
        $region36: #{tpu_custom_call.1} parent=27 // pred_fallthru
          _
        %p197 = pneg %p62
        %p198 = pneg %p59
        %s199 = sand.u32 %s77, 1
        %s200 = scalar_lea.sflag [#allocation7], %s199
        %s201 = sand.u32 %s77, 1
        %s202 = smul.addr %s201, 2048
        %s203 = scalar_lea.vmem [#allocation6], %s202
        %p204 = pneg %p90
        %p205 = pneg %p87
        %p206 = pneg %p118
        %p207 = pneg %p115
        %s208 = sand.u32 %s105, 1
        %s209 = scalar_lea.sflag [#allocation5], %s208
        %s210 = sand.u32 %s105, 1
        %s211 = smul.addr %s210, 16
        %s212 = scalar_lea.vmem [#allocation8], %s211
        %s213 = smul.u32 4, %s27
        %s214 = smul.u32 64, %s27
        %s215 = smul.u32 4, %s26
        %s216 = smul.u32 4, %s26
        %p217 = scmp.eq.s32.totalorder %s27, 0
        // Predicated region
        $region37: #{tpu_custom_call.1} parent=27 // pred_check
          %p218 = pneg %p217
        $region38: #{tpu_custom_call.1} parent=27 // pred_check_branch
          %220 = sbr.rel (%p218) target = $region40
        $region39: #{tpu_custom_call.1} parent=27 // pred_region
          %221 = vst [vmem:[#allocation2] sm:$0xff] 0.0
          %222 = vst [vmem:[#allocation2 + $0x8] sm:$0xff] 0.0
          %223 = vst [vmem:[#allocation2 + $0x10] sm:$0xff] 0.0
          %224 = vst [vmem:[#allocation2 + $0x18] sm:$0xff] 0.0
        $region40: #{tpu_custom_call.1} parent=27 // pred_fallthru
          _
        %v225 = vld [vmem:[#allocation2] sm:$0xff]
        %v226 = vld [vmem:[#allocation2 + $0x8] sm:$0xff]
        %v227 = vld [vmem:[#allocation2 + $0x10] sm:$0xff]
        %v228 = vld [vmem:[#allocation2 + $0x18] sm:$0xff]
        %v229 = vld [vmem:[#allocation3] sm:$0xff]
        %v230 = vld [vmem:[#allocation3 + $0x8] sm:$0xff]
        %v231 = vld [vmem:[#allocation3 + $0x10] sm:$0xff]
        %v232 = vld [vmem:[#allocation3 + $0x18] sm:$0xff]
        %v233 = vpack.c.bf16 %v229, %v229
        %v234 = vpack.c.bf16 %v230, %v230
        %v235 = vpack.c.bf16 %v231, %v231
        %v236 = vpack.c.bf16 %v232, %v232
        %v237 = vld [vmem:[%s192] sm:$0xff]
        %v238 = vld [vmem:[%s192 + $0x8] sm:$0xff]
        %v239 = vld [vmem:[%s192 + $0x10] sm:$0xff]
        %v240 = vld [vmem:[%s192 + $0x18] sm:$0xff]
        %v241 = vld [vmem:[%s192 + $0x20] sm:$0xff]
        %v242 = vld [vmem:[%s192 + $0x28] sm:$0xff]
        %v243 = vld [vmem:[%s192 + $0x30] sm:$0xff]
        %v244 = vld [vmem:[%s192 + $0x38] sm:$0xff]
        %v245 = vld [vmem:[%s192 + $0x40] sm:$0xff]
        %v246 = vld [vmem:[%s192 + $0x48] sm:$0xff]
        %v247 = vld [vmem:[%s192 + $0x50] sm:$0xff]
        %v248 = vld [vmem:[%s192 + $0x58] sm:$0xff]
        %v249 = vld [vmem:[%s192 + $0x60] sm:$0xff]
        %v250 = vld [vmem:[%s192 + $0x68] sm:$0xff]
        %v251 = vld [vmem:[%s192 + $0x70] sm:$0xff]
        %v252 = vld [vmem:[%s192 + $0x78] sm:$0xff]
        %v253 = vld [vmem:[%s192 + $0x80] sm:$0xff]
        %v254 = vld [vmem:[%s192 + $0x88] sm:$0xff]
        %v255 = vld [vmem:[%s192 + $0x90] sm:$0xff]
        %v256 = vld [vmem:[%s192 + $0x98] sm:$0xff]
        %v257 = vld [vmem:[%s192 + $0xa0] sm:$0xff]
        %v258 = vld [vmem:[%s192 + $0xa8] sm:$0xff]
        %v259 = vld [vmem:[%s192 + $0xb0] sm:$0xff]
        %v260 = vld [vmem:[%s192 + $0xb8] sm:$0xff]
        %v261 = vld [vmem:[%s192 + $0xc0] sm:$0xff]
        %v262 = vld [vmem:[%s192 + $0xc8] sm:$0xff]
        %v263 = vld [vmem:[%s192 + $0xd0] sm:$0xff]
        %v264 = vld [vmem:[%s192 + $0xd8] sm:$0xff]
        %v265 = vld [vmem:[%s192 + $0xe0] sm:$0xff]
        %v266 = vld [vmem:[%s192 + $0xe8] sm:$0xff]
        %v267 = vld [vmem:[%s192 + $0xf0] sm:$0xff]
        %v268 = vld [vmem:[%s192 + $0xf8] sm:$0xff]
        %v269 = vld [vmem:[%s192 + $0x100] sm:$0xff]
        %v270 = vld [vmem:[%s192 + $0x108] sm:$0xff]
        %v271 = vld [vmem:[%s192 + $0x110] sm:$0xff]
        %v272 = vld [vmem:[%s192 + $0x118] sm:$0xff]
        %v273 = vld [vmem:[%s192 + $0x120] sm:$0xff]
        %v274 = vld [vmem:[%s192 + $0x128] sm:$0xff]
        %v275 = vld [vmem:[%s192 + $0x130] sm:$0xff]
        %v276 = vld [vmem:[%s192 + $0x138] sm:$0xff]
        %v277 = vld [vmem:[%s192 + $0x140] sm:$0xff]
        %v278 = vld [vmem:[%s192 + $0x148] sm:$0xff]
        %v279 = vld [vmem:[%s192 + $0x150] sm:$0xff]
        %v280 = vld [vmem:[%s192 + $0x158] sm:$0xff]
        %v281 = vld [vmem:[%s192 + $0x160] sm:$0xff]
        %v282 = vld [vmem:[%s192 + $0x168] sm:$0xff]
        %v283 = vld [vmem:[%s192 + $0x170] sm:$0xff]
        %v284 = vld [vmem:[%s192 + $0x178] sm:$0xff]
        %v285 = vld [vmem:[%s192 + $0x180] sm:$0xff]
        %v286 = vld [vmem:[%s192 + $0x188] sm:$0xff]
        %v287 = vld [vmem:[%s192 + $0x190] sm:$0xff]
        %v288 = vld [vmem:[%s192 + $0x198] sm:$0xff]
        %v289 = vld [vmem:[%s192 + $0x1a0] sm:$0xff]
        %v290 = vld [vmem:[%s192 + $0x1a8] sm:$0xff]
        %v291 = vld [vmem:[%s192 + $0x1b0] sm:$0xff]
        %v292 = vld [vmem:[%s192 + $0x1b8] sm:$0xff]
        %v293 = vld [vmem:[%s192 + $0x1c0] sm:$0xff]
        %v294 = vld [vmem:[%s192 + $0x1c8] sm:$0xff]
        %v295 = vld [vmem:[%s192 + $0x1d0] sm:$0xff]
        %v296 = vld [vmem:[%s192 + $0x1d8] sm:$0xff]
        %v297 = vld [vmem:[%s192 + $0x1e0] sm:$0xff]
        %v298 = vld [vmem:[%s192 + $0x1e8] sm:$0xff]
        %v299 = vld [vmem:[%s192 + $0x1f0] sm:$0xff]
        %v300 = vld [vmem:[%s192 + $0x1f8] sm:$0xff]
        %v301 = vld [vmem:[%s192 + $0x200] sm:$0xff]
        %v302 = vld [vmem:[%s192 + $0x208] sm:$0xff]
        %v303 = vld [vmem:[%s192 + $0x210] sm:$0xff]
        %v304 = vld [vmem:[%s192 + $0x218] sm:$0xff]
        %v305 = vld [vmem:[%s192 + $0x220] sm:$0xff]
        %v306 = vld [vmem:[%s192 + $0x228] sm:$0xff]
        %v307 = vld [vmem:[%s192 + $0x230] sm:$0xff]
        %v308 = vld [vmem:[%s192 + $0x238] sm:$0xff]
        %v309 = vld [vmem:[%s192 + $0x240] sm:$0xff]
        %v310 = vld [vmem:[%s192 + $0x248] sm:$0xff]
        %v311 = vld [vmem:[%s192 + $0x250] sm:$0xff]
        %v312 = vld [vmem:[%s192 + $0x258] sm:$0xff]
        %v313 = vld [vmem:[%s192 + $0x260] sm:$0xff]
        %v314 = vld [vmem:[%s192 + $0x268] sm:$0xff]
        %v315 = vld [vmem:[%s192 + $0x270] sm:$0xff]
        %v316 = vld [vmem:[%s192 + $0x278] sm:$0xff]
        %v317 = vld [vmem:[%s192 + $0x280] sm:$0xff]
        %v318 = vld [vmem:[%s192 + $0x288] sm:$0xff]
        %v319 = vld [vmem:[%s192 + $0x290] sm:$0xff]
        %v320 = vld [vmem:[%s192 + $0x298] sm:$0xff]
        %v321 = vld [vmem:[%s192 + $0x2a0] sm:$0xff]
        %v322 = vld [vmem:[%s192 + $0x2a8] sm:$0xff]
        %v323 = vld [vmem:[%s192 + $0x2b0] sm:$0xff]
        %v324 = vld [vmem:[%s192 + $0x2b8] sm:$0xff]
        %v325 = vld [vmem:[%s192 + $0x2c0] sm:$0xff]
        %v326 = vld [vmem:[%s192 + $0x2c8] sm:$0xff]
        %v327 = vld [vmem:[%s192 + $0x2d0] sm:$0xff]
        %v328 = vld [vmem:[%s192 + $0x2d8] sm:$0xff]
        %v329 = vld [vmem:[%s192 + $0x2e0] sm:$0xff]
        %v330 = vld [vmem:[%s192 + $0x2e8] sm:$0xff]
        %v331 = vld [vmem:[%s192 + $0x2f0] sm:$0xff]
        %v332 = vld [vmem:[%s192 + $0x2f8] sm:$0xff]
        %v333 = vld [vmem:[%s192 + $0x300] sm:$0xff]
        %v334 = vld [vmem:[%s192 + $0x308] sm:$0xff]
        %v335 = vld [vmem:[%s192 + $0x310] sm:$0xff]
        %v336 = vld [vmem:[%s192 + $0x318] sm:$0xff]
        %v337 = vld [vmem:[%s192 + $0x320] sm:$0xff]
        %v338 = vld [vmem:[%s192 + $0x328] sm:$0xff]
        %v339 = vld [vmem:[%s192 + $0x330] sm:$0xff]
        %v340 = vld [vmem:[%s192 + $0x338] sm:$0xff]
        %v341 = vld [vmem:[%s192 + $0x340] sm:$0xff]
        %v342 = vld [vmem:[%s192 + $0x348] sm:$0xff]
        %v343 = vld [vmem:[%s192 + $0x350] sm:$0xff]
        %v344 = vld [vmem:[%s192 + $0x358] sm:$0xff]
        %v345 = vld [vmem:[%s192 + $0x360] sm:$0xff]
        %v346 = vld [vmem:[%s192 + $0x368] sm:$0xff]
        %v347 = vld [vmem:[%s192 + $0x370] sm:$0xff]
        %v348 = vld [vmem:[%s192 + $0x378] sm:$0xff]
        %v349 = vld [vmem:[%s192 + $0x380] sm:$0xff]
        %v350 = vld [vmem:[%s192 + $0x388] sm:$0xff]
        %v351 = vld [vmem:[%s192 + $0x390] sm:$0xff]
        %v352 = vld [vmem:[%s192 + $0x398] sm:$0xff]
        %v353 = vld [vmem:[%s192 + $0x3a0] sm:$0xff]
        %v354 = vld [vmem:[%s192 + $0x3a8] sm:$0xff]
        %v355 = vld [vmem:[%s192 + $0x3b0] sm:$0xff]
        %v356 = vld [vmem:[%s192 + $0x3b8] sm:$0xff]
        %v357 = vld [vmem:[%s192 + $0x3c0] sm:$0xff]
        %v358 = vld [vmem:[%s192 + $0x3c8] sm:$0xff]
        %v359 = vld [vmem:[%s192 + $0x3d0] sm:$0xff]
        %v360 = vld [vmem:[%s192 + $0x3d8] sm:$0xff]
        %v361 = vld [vmem:[%s192 + $0x3e0] sm:$0xff]
        %v362 = vld [vmem:[%s192 + $0x3e8] sm:$0xff]
        %v363 = vld [vmem:[%s192 + $0x3f0] sm:$0xff]
        %v364 = vld [vmem:[%s192 + $0x3f8] sm:$0xff]
        %v365 = vld [vmem:[%s192 + $0x400] sm:$0xff]
        %v366 = vld [vmem:[%s192 + $0x408] sm:$0xff]
        %v367 = vld [vmem:[%s192 + $0x410] sm:$0xff]
        %v368 = vld [vmem:[%s192 + $0x418] sm:$0xff]
        %v369 = vld [vmem:[%s192 + $0x420] sm:$0xff]
        %v370 = vld [vmem:[%s192 + $0x428] sm:$0xff]
        %v371 = vld [vmem:[%s192 + $0x430] sm:$0xff]
        %v372 = vld [vmem:[%s192 + $0x438] sm:$0xff]
        %v373 = vld [vmem:[%s192 + $0x440] sm:$0xff]
        %v374 = vld [vmem:[%s192 + $0x448] sm:$0xff]
        %v375 = vld [vmem:[%s192 + $0x450] sm:$0xff]
        %v376 = vld [vmem:[%s192 + $0x458] sm:$0xff]
        %v377 = vld [vmem:[%s192 + $0x460] sm:$0xff]
        %v378 = vld [vmem:[%s192 + $0x468] sm:$0xff]
        %v379 = vld [vmem:[%s192 + $0x470] sm:$0xff]
        %v380 = vld [vmem:[%s192 + $0x478] sm:$0xff]
        %v381 = vld [vmem:[%s192 + $0x480] sm:$0xff]
        %v382 = vld [vmem:[%s192 + $0x488] sm:$0xff]
        %v383 = vld [vmem:[%s192 + $0x490] sm:$0xff]
        %v384 = vld [vmem:[%s192 + $0x498] sm:$0xff]
        %v385 = vld [vmem:[%s192 + $0x4a0] sm:$0xff]
        %v386 = vld [vmem:[%s192 + $0x4a8] sm:$0xff]
        %v387 = vld [vmem:[%s192 + $0x4b0] sm:$0xff]
        %v388 = vld [vmem:[%s192 + $0x4b8] sm:$0xff]
        %v389 = vld [vmem:[%s192 + $0x4c0] sm:$0xff]
        %v390 = vld [vmem:[%s192 + $0x4c8] sm:$0xff]
        %v391 = vld [vmem:[%s192 + $0x4d0] sm:$0xff]
        %v392 = vld [vmem:[%s192 + $0x4d8] sm:$0xff]
        %v393 = vld [vmem:[%s192 + $0x4e0] sm:$0xff]
        %v394 = vld [vmem:[%s192 + $0x4e8] sm:$0xff]
        %v395 = vld [vmem:[%s192 + $0x4f0] sm:$0xff]
        %v396 = vld [vmem:[%s192 + $0x4f8] sm:$0xff]
        %v397 = vld [vmem:[%s192 + $0x500] sm:$0xff]
        %v398 = vld [vmem:[%s192 + $0x508] sm:$0xff]
        %v399 = vld [vmem:[%s192 + $0x510] sm:$0xff]
        %v400 = vld [vmem:[%s192 + $0x518] sm:$0xff]
        %v401 = vld [vmem:[%s192 + $0x520] sm:$0xff]
        %v402 = vld [vmem:[%s192 + $0x528] sm:$0xff]
        %v403 = vld [vmem:[%s192 + $0x530] sm:$0xff]
        %v404 = vld [vmem:[%s192 + $0x538] sm:$0xff]
        %v405 = vld [vmem:[%s192 + $0x540] sm:$0xff]
        %v406 = vld [vmem:[%s192 + $0x548] sm:$0xff]
        %v407 = vld [vmem:[%s192 + $0x550] sm:$0xff]
        %v408 = vld [vmem:[%s192 + $0x558] sm:$0xff]
        %v409 = vld [vmem:[%s192 + $0x560] sm:$0xff]
        %v410 = vld [vmem:[%s192 + $0x568] sm:$0xff]
        %v411 = vld [vmem:[%s192 + $0x570] sm:$0xff]
        %v412 = vld [vmem:[%s192 + $0x578] sm:$0xff]
        %v413 = vld [vmem:[%s192 + $0x580] sm:$0xff]
        %v414 = vld [vmem:[%s192 + $0x588] sm:$0xff]
        %v415 = vld [vmem:[%s192 + $0x590] sm:$0xff]
        %v416 = vld [vmem:[%s192 + $0x598] sm:$0xff]
        %v417 = vld [vmem:[%s192 + $0x5a0] sm:$0xff]
        %v418 = vld [vmem:[%s192 + $0x5a8] sm:$0xff]
        %v419 = vld [vmem:[%s192 + $0x5b0] sm:$0xff]
        %v420 = vld [vmem:[%s192 + $0x5b8] sm:$0xff]
        %v421 = vld [vmem:[%s192 + $0x5c0] sm:$0xff]
        %v422 = vld [vmem:[%s192 + $0x5c8] sm:$0xff]
        %v423 = vld [vmem:[%s192 + $0x5d0] sm:$0xff]
        %v424 = vld [vmem:[%s192 + $0x5d8] sm:$0xff]
        %v425 = vld [vmem:[%s192 + $0x5e0] sm:$0xff]
        %v426 = vld [vmem:[%s192 + $0x5e8] sm:$0xff]
        %v427 = vld [vmem:[%s192 + $0x5f0] sm:$0xff]
        %v428 = vld [vmem:[%s192 + $0x5f8] sm:$0xff]
        %v429 = vld [vmem:[%s192 + $0x600] sm:$0xff]
        %v430 = vld [vmem:[%s192 + $0x608] sm:$0xff]
        %v431 = vld [vmem:[%s192 + $0x610] sm:$0xff]
        %v432 = vld [vmem:[%s192 + $0x618] sm:$0xff]
        %v433 = vld [vmem:[%s192 + $0x620] sm:$0xff]
        %v434 = vld [vmem:[%s192 + $0x628] sm:$0xff]
        %v435 = vld [vmem:[%s192 + $0x630] sm:$0xff]
        %v436 = vld [vmem:[%s192 + $0x638] sm:$0xff]
        %v437 = vld [vmem:[%s192 + $0x640] sm:$0xff]
        %v438 = vld [vmem:[%s192 + $0x648] sm:$0xff]
        %v439 = vld [vmem:[%s192 + $0x650] sm:$0xff]
        %v440 = vld [vmem:[%s192 + $0x658] sm:$0xff]
        %v441 = vld [vmem:[%s192 + $0x660] sm:$0xff]
        %v442 = vld [vmem:[%s192 + $0x668] sm:$0xff]
        %v443 = vld [vmem:[%s192 + $0x670] sm:$0xff]
        %v444 = vld [vmem:[%s192 + $0x678] sm:$0xff]
        %v445 = vld [vmem:[%s192 + $0x680] sm:$0xff]
        %v446 = vld [vmem:[%s192 + $0x688] sm:$0xff]
        %v447 = vld [vmem:[%s192 + $0x690] sm:$0xff]
        %v448 = vld [vmem:[%s192 + $0x698] sm:$0xff]
        %v449 = vld [vmem:[%s192 + $0x6a0] sm:$0xff]
        %v450 = vld [vmem:[%s192 + $0x6a8] sm:$0xff]
        %v451 = vld [vmem:[%s192 + $0x6b0] sm:$0xff]
        %v452 = vld [vmem:[%s192 + $0x6b8] sm:$0xff]
        %v453 = vld [vmem:[%s192 + $0x6c0] sm:$0xff]
        %v454 = vld [vmem:[%s192 + $0x6c8] sm:$0xff]
        %v455 = vld [vmem:[%s192 + $0x6d0] sm:$0xff]
        %v456 = vld [vmem:[%s192 + $0x6d8] sm:$0xff]
        %v457 = vld [vmem:[%s192 + $0x6e0] sm:$0xff]
        %v458 = vld [vmem:[%s192 + $0x6e8] sm:$0xff]
        %v459 = vld [vmem:[%s192 + $0x6f0] sm:$0xff]
        %v460 = vld [vmem:[%s192 + $0x6f8] sm:$0xff]
        %v461 = vld [vmem:[%s192 + $0x700] sm:$0xff]
        %v462 = vld [vmem:[%s192 + $0x708] sm:$0xff]
        %v463 = vld [vmem:[%s192 + $0x710] sm:$0xff]
        %v464 = vld [vmem:[%s192 + $0x718] sm:$0xff]
        %v465 = vld [vmem:[%s192 + $0x720] sm:$0xff]
        %v466 = vld [vmem:[%s192 + $0x728] sm:$0xff]
        %v467 = vld [vmem:[%s192 + $0x730] sm:$0xff]
        %v468 = vld [vmem:[%s192 + $0x738] sm:$0xff]
        %v469 = vld [vmem:[%s192 + $0x740] sm:$0xff]
        %v470 = vld [vmem:[%s192 + $0x748] sm:$0xff]
        %v471 = vld [vmem:[%s192 + $0x750] sm:$0xff]
        %v472 = vld [vmem:[%s192 + $0x758] sm:$0xff]
        %v473 = vld [vmem:[%s192 + $0x760] sm:$0xff]
        %v474 = vld [vmem:[%s192 + $0x768] sm:$0xff]
        %v475 = vld [vmem:[%s192 + $0x770] sm:$0xff]
        %v476 = vld [vmem:[%s192 + $0x778] sm:$0xff]
        %v477 = vld [vmem:[%s192 + $0x780] sm:$0xff]
        %v478 = vld [vmem:[%s192 + $0x788] sm:$0xff]
        %v479 = vld [vmem:[%s192 + $0x790] sm:$0xff]
        %v480 = vld [vmem:[%s192 + $0x798] sm:$0xff]
        %v481 = vld [vmem:[%s192 + $0x7a0] sm:$0xff]
        %v482 = vld [vmem:[%s192 + $0x7a8] sm:$0xff]
        %v483 = vld [vmem:[%s192 + $0x7b0] sm:$0xff]
        %v484 = vld [vmem:[%s192 + $0x7b8] sm:$0xff]
        %v485 = vld [vmem:[%s192 + $0x7c0] sm:$0xff]
        %v486 = vld [vmem:[%s192 + $0x7c8] sm:$0xff]
        %v487 = vld [vmem:[%s192 + $0x7d0] sm:$0xff]
        %v488 = vld [vmem:[%s192 + $0x7d8] sm:$0xff]
        %v489 = vld [vmem:[%s192 + $0x7e0] sm:$0xff]
        %v490 = vld [vmem:[%s192 + $0x7e8] sm:$0xff]
        %v491 = vld [vmem:[%s192 + $0x7f0] sm:$0xff]
        %v492 = vld [vmem:[%s192 + $0x7f8] sm:$0xff]
        %v493 = vpack.c.bf16 %v241, %v237
        %v494 = vpack.c.bf16 %v242, %v238
        %v495 = vpack.c.bf16 %v243, %v239
        %v496 = vpack.c.bf16 %v244, %v240
        %v497 = vpack.c.bf16 %v249, %v245
        %v498 = vpack.c.bf16 %v250, %v246
        %v499 = vpack.c.bf16 %v251, %v247
        %v500 = vpack.c.bf16 %v252, %v248
        %v501 = vpack.c.bf16 %v257, %v253
        %v502 = vpack.c.bf16 %v258, %v254
        %v503 = vpack.c.bf16 %v259, %v255
        %v504 = vpack.c.bf16 %v260, %v256
        %v505 = vpack.c.bf16 %v265, %v261
        %v506 = vpack.c.bf16 %v266, %v262
        %v507 = vpack.c.bf16 %v267, %v263
        %v508 = vpack.c.bf16 %v268, %v264
        %v509 = vpack.c.bf16 %v273, %v269
        %v510 = vpack.c.bf16 %v274, %v270
        %v511 = vpack.c.bf16 %v275, %v271
        %v512 = vpack.c.bf16 %v276, %v272
        %v513 = vpack.c.bf16 %v281, %v277
        %v514 = vpack.c.bf16 %v282, %v278
        %v515 = vpack.c.bf16 %v283, %v279
        %v516 = vpack.c.bf16 %v284, %v280
        %v517 = vpack.c.bf16 %v289, %v285
        %v518 = vpack.c.bf16 %v290, %v286
        %v519 = vpack.c.bf16 %v291, %v287
        %v520 = vpack.c.bf16 %v292, %v288
        %v521 = vpack.c.bf16 %v297, %v293
        %v522 = vpack.c.bf16 %v298, %v294
        %v523 = vpack.c.bf16 %v299, %v295
        %v524 = vpack.c.bf16 %v300, %v296
        %v525 = vpack.c.bf16 %v305, %v301
        %v526 = vpack.c.bf16 %v306, %v302
        %v527 = vpack.c.bf16 %v307, %v303
        %v528 = vpack.c.bf16 %v308, %v304
        %v529 = vpack.c.bf16 %v313, %v309
        %v530 = vpack.c.bf16 %v314, %v310
        %v531 = vpack.c.bf16 %v315, %v311
        %v532 = vpack.c.bf16 %v316, %v312
        %v533 = vpack.c.bf16 %v321, %v317
        %v534 = vpack.c.bf16 %v322, %v318
        %v535 = vpack.c.bf16 %v323, %v319
        %v536 = vpack.c.bf16 %v324, %v320
        %v537 = vpack.c.bf16 %v329, %v325
        %v538 = vpack.c.bf16 %v330, %v326
        %v539 = vpack.c.bf16 %v331, %v327
        %v540 = vpack.c.bf16 %v332, %v328
        %v541 = vpack.c.bf16 %v337, %v333
        %v542 = vpack.c.bf16 %v338, %v334
        %v543 = vpack.c.bf16 %v339, %v335
        %v544 = vpack.c.bf16 %v340, %v336
        %v545 = vpack.c.bf16 %v345, %v341
        %v546 = vpack.c.bf16 %v346, %v342
        %v547 = vpack.c.bf16 %v347, %v343
        %v548 = vpack.c.bf16 %v348, %v344
        %v549 = vpack.c.bf16 %v353, %v349
        %v550 = vpack.c.bf16 %v354, %v350
        %v551 = vpack.c.bf16 %v355, %v351
        %v552 = vpack.c.bf16 %v356, %v352
        %v553 = vpack.c.bf16 %v361, %v357
        %v554 = vpack.c.bf16 %v362, %v358
        %v555 = vpack.c.bf16 %v363, %v359
        %v556 = vpack.c.bf16 %v364, %v360
        %v557 = vpack.c.bf16 %v369, %v365
        %v558 = vpack.c.bf16 %v370, %v366
        %v559 = vpack.c.bf16 %v371, %v367
        %v560 = vpack.c.bf16 %v372, %v368
        %v561 = vpack.c.bf16 %v377, %v373
        %v562 = vpack.c.bf16 %v378, %v374
        %v563 = vpack.c.bf16 %v379, %v375
        %v564 = vpack.c.bf16 %v380, %v376
        %v565 = vpack.c.bf16 %v385, %v381
        %v566 = vpack.c.bf16 %v386, %v382
        %v567 = vpack.c.bf16 %v387, %v383
        %v568 = vpack.c.bf16 %v388, %v384
        %v569 = vpack.c.bf16 %v393, %v389
        %v570 = vpack.c.bf16 %v394, %v390
        %v571 = vpack.c.bf16 %v395, %v391
        %v572 = vpack.c.bf16 %v396, %v392
        %v573 = vpack.c.bf16 %v401, %v397
        %v574 = vpack.c.bf16 %v402, %v398
        %v575 = vpack.c.bf16 %v403, %v399
        %v576 = vpack.c.bf16 %v404, %v400
        %v577 = vpack.c.bf16 %v409, %v405
        %v578 = vpack.c.bf16 %v410, %v406
        %v579 = vpack.c.bf16 %v411, %v407
        %v580 = vpack.c.bf16 %v412, %v408
        %v581 = vpack.c.bf16 %v417, %v413
        %v582 = vpack.c.bf16 %v418, %v414
        %v583 = vpack.c.bf16 %v419, %v415
        %v584 = vpack.c.bf16 %v420, %v416
        %v585 = vpack.c.bf16 %v425, %v421
        %v586 = vpack.c.bf16 %v426, %v422
        %v587 = vpack.c.bf16 %v427, %v423
        %v588 = vpack.c.bf16 %v428, %v424
        %v589 = vpack.c.bf16 %v433, %v429
        %v590 = vpack.c.bf16 %v434, %v430
        %v591 = vpack.c.bf16 %v435, %v431
        %v592 = vpack.c.bf16 %v436, %v432
        %v593 = vpack.c.bf16 %v441, %v437
        %v594 = vpack.c.bf16 %v442, %v438
        %v595 = vpack.c.bf16 %v443, %v439
        %v596 = vpack.c.bf16 %v444, %v440
        %v597 = vpack.c.bf16 %v449, %v445
        %v598 = vpack.c.bf16 %v450, %v446
        %v599 = vpack.c.bf16 %v451, %v447
        %v600 = vpack.c.bf16 %v452, %v448
        %v601 = vpack.c.bf16 %v457, %v453
        %v602 = vpack.c.bf16 %v458, %v454
        %v603 = vpack.c.bf16 %v459, %v455
        %v604 = vpack.c.bf16 %v460, %v456
        %v605 = vpack.c.bf16 %v465, %v461
        %v606 = vpack.c.bf16 %v466, %v462
        %v607 = vpack.c.bf16 %v467, %v463
        %v608 = vpack.c.bf16 %v468, %v464
        %v609 = vpack.c.bf16 %v473, %v469
        %v610 = vpack.c.bf16 %v474, %v470
        %v611 = vpack.c.bf16 %v475, %v471
        %v612 = vpack.c.bf16 %v476, %v472
        %v613 = vpack.c.bf16 %v481, %v477
        %v614 = vpack.c.bf16 %v482, %v478
        %v615 = vpack.c.bf16 %v483, %v479
        %v616 = vpack.c.bf16 %v484, %v480
        %v617 = vpack.c.bf16 %v489, %v485
        %v618 = vpack.c.bf16 %v490, %v486
        %v619 = vpack.c.bf16 %v491, %v487
        %v620 = vpack.c.bf16 %v492, %v488
        %621 = vmatprep.subr.bf16.mxu0 %v522
        %622 = vmatpush1.bf16.msra.mxu0 %v521
        %623 = vmatprep.subr.bf16.mxu0 %v518
        %624 = vmatpush1.bf16.msra.mxu0 %v517
        %625 = vmatprep.subr.bf16.mxu0 %v514
        %626 = vmatpush1.bf16.msra.mxu0 %v513
        %627 = vmatprep.subr.bf16.mxu0 %v510
        %628 = vmatpush1.bf16.msra.mxu0 %v509
        %629 = vmatprep.subr.bf16.mxu0 %v506
        %630 = vmatpush1.bf16.msra.mxu0 %v505
        %631 = vmatprep.subr.bf16.mxu0 %v502
        %632 = vmatpush1.bf16.msra.mxu0 %v501
        %633 = vmatprep.subr.bf16.mxu0 %v498
        %634 = vmatpush1.bf16.msra.mxu0 %v497
        %635 = vmatprep.subr.bf16.mxu0 %v494
        %636 = vmatpush1.bf16.msra.mxu0 %v493
        %637 = vmatprep.subr.bf16.mxu0 %v554
        %638 = vmatpush2.bf16.msra.mxu0 %v553
        %639 = vmatprep.subr.bf16.mxu0 %v550
        %640 = vmatpush2.bf16.msra.mxu0 %v549
        %641 = vmatprep.subr.bf16.mxu0 %v546
        %642 = vmatpush2.bf16.msra.mxu0 %v545
        %643 = vmatprep.subr.bf16.mxu0 %v542
        %644 = vmatpush2.bf16.msra.mxu0 %v541
        %645 = vmatprep.subr.bf16.mxu0 %v538
        %646 = vmatpush2.bf16.msra.mxu0 %v537
        %647 = vmatprep.subr.bf16.mxu0 %v534
        %648 = vmatpush2.bf16.msra.mxu0 %v533
        %649 = vmatprep.subr.bf16.mxu0 %v530
        %650 = vmatpush2.bf16.msra.mxu0 %v529
        %651 = vmatprep.subr.bf16.mxu0 %v526
        %652 = vmatpush2.bf16.msra.mxu0 %v525
        %653 = vmatprep.mubr.bf16.mxu0 %v234
        %654 = vmatmul.mubr.bf16.gmra.mxu0 %v233
        %v655 = vpop.f32.mrf.mxu0
        %v656 = vadd.f32 0.0, %v655
        %v657 = vpop.f32.mrf.mxu0
        %v658 = vadd.f32 0.0, %v657
        %v659 = vpop.f32.mrf.mxu0
        %v660 = vpop.f32.mrf.mxu0
        %661 = vdwg.mxu0
        %662 = vmatprep.subr.bf16.mxu0 %v586
        %663 = vmatpush1.bf16.msra.mxu0 %v585
        %664 = vmatprep.subr.bf16.mxu0 %v582
        %665 = vmatpush1.bf16.msra.mxu0 %v581
        %666 = vmatprep.subr.bf16.mxu0 %v578
        %667 = vmatpush1.bf16.msra.mxu0 %v577
        %668 = vmatprep.subr.bf16.mxu0 %v574
        %669 = vmatpush1.bf16.msra.mxu0 %v573
        %670 = vmatprep.subr.bf16.mxu0 %v570
        %671 = vmatpush1.bf16.msra.mxu0 %v569
        %672 = vmatprep.subr.bf16.mxu0 %v566
        %673 = vmatpush1.bf16.msra.mxu0 %v565
        %674 = vmatprep.subr.bf16.mxu0 %v562
        %675 = vmatpush1.bf16.msra.mxu0 %v561
        %676 = vmatprep.subr.bf16.mxu0 %v558
        %677 = vmatpush1.bf16.msra.mxu0 %v557
        %678 = vmatprep.subr.bf16.mxu0 %v618
        %679 = vmatpush2.bf16.msra.mxu0 %v617
        %680 = vmatprep.subr.bf16.mxu0 %v614
        %681 = vmatpush2.bf16.msra.mxu0 %v613
        %682 = vmatprep.subr.bf16.mxu0 %v610
        %683 = vmatpush2.bf16.msra.mxu0 %v609
        %684 = vmatprep.subr.bf16.mxu0 %v606
        %685 = vmatpush2.bf16.msra.mxu0 %v605
        %686 = vmatprep.subr.bf16.mxu0 %v602
        %687 = vmatpush2.bf16.msra.mxu0 %v601
        %688 = vmatprep.subr.bf16.mxu0 %v598
        %689 = vmatpush2.bf16.msra.mxu0 %v597
        %690 = vmatprep.subr.bf16.mxu0 %v594
        %691 = vmatpush2.bf16.msra.mxu0 %v593
        %692 = vmatprep.subr.bf16.mxu0 %v590
        %693 = vmatpush2.bf16.msra.mxu0 %v589
        %694 = vmatprep.mubr.bf16.mxu0 %v236
        %695 = vmatmul.mubr.bf16.gmra.mxu0 %v235
        %v696 = vpop.f32.mrf.mxu0
        %v697 = vadd.f32 %v656, %v696
        %v698 = vpop.f32.mrf.mxu0
        %v699 = vadd.f32 %v658, %v698
        %v700 = vpop.f32.mrf.mxu0
        %v701 = vpop.f32.mrf.mxu0
        %702 = vdwg.mxu0
        %703 = vmatprep.subr.bf16.mxu0 %v524
        %704 = vmatpush1.bf16.msra.mxu0 %v523
        %705 = vmatprep.subr.bf16.mxu0 %v520
        %706 = vmatpush1.bf16.msra.mxu0 %v519
        %707 = vmatprep.subr.bf16.mxu0 %v516
        %708 = vmatpush1.bf16.msra.mxu0 %v515
        %709 = vmatprep.subr.bf16.mxu0 %v512
        %710 = vmatpush1.bf16.msra.mxu0 %v511
        %711 = vmatprep.subr.bf16.mxu0 %v508
        %712 = vmatpush1.bf16.msra.mxu0 %v507
        %713 = vmatprep.subr.bf16.mxu0 %v504
        %714 = vmatpush1.bf16.msra.mxu0 %v503
        %715 = vmatprep.subr.bf16.mxu0 %v500
        %716 = vmatpush1.bf16.msra.mxu0 %v499
        %717 = vmatprep.subr.bf16.mxu0 %v496
        %718 = vmatpush1.bf16.msra.mxu0 %v495
        %719 = vmatprep.subr.bf16.mxu0 %v556
        %720 = vmatpush2.bf16.msra.mxu0 %v555
        %721 = vmatprep.subr.bf16.mxu0 %v552
        %722 = vmatpush2.bf16.msra.mxu0 %v551
        %723 = vmatprep.subr.bf16.mxu0 %v548
        %724 = vmatpush2.bf16.msra.mxu0 %v547
        %725 = vmatprep.subr.bf16.mxu0 %v544
        %726 = vmatpush2.bf16.msra.mxu0 %v543
        %727 = vmatprep.subr.bf16.mxu0 %v540
        %728 = vmatpush2.bf16.msra.mxu0 %v539
        %729 = vmatprep.subr.bf16.mxu0 %v536
        %730 = vmatpush2.bf16.msra.mxu0 %v535
        %731 = vmatprep.subr.bf16.mxu0 %v532
        %732 = vmatpush2.bf16.msra.mxu0 %v531
        %733 = vmatprep.subr.bf16.mxu0 %v528
        %734 = vmatpush2.bf16.msra.mxu0 %v527
        %735 = vmatprep.mubr.bf16.mxu0 %v234
        %736 = vmatmul.mubr.bf16.gmra.mxu0 %v233
        %v737 = vpop.f32.mrf.mxu0
        %v738 = vadd.f32 0.0, %v737
        %v739 = vpop.f32.mrf.mxu0
        %v740 = vadd.f32 0.0, %v739
        %v741 = vpop.f32.mrf.mxu0
        %v742 = vpop.f32.mrf.mxu0
        %743 = vdwg.mxu0
        %744 = vmatprep.subr.bf16.mxu0 %v588
        %745 = vmatpush1.bf16.msra.mxu0 %v587
        %746 = vmatprep.subr.bf16.mxu0 %v584
        %747 = vmatpush1.bf16.msra.mxu0 %v583
        %748 = vmatprep.subr.bf16.mxu0 %v580
        %749 = vmatpush1.bf16.msra.mxu0 %v579
        %750 = vmatprep.subr.bf16.mxu0 %v576
        %751 = vmatpush1.bf16.msra.mxu0 %v575
        %752 = vmatprep.subr.bf16.mxu0 %v572
        %753 = vmatpush1.bf16.msra.mxu0 %v571
        %754 = vmatprep.subr.bf16.mxu0 %v568
        %755 = vmatpush1.bf16.msra.mxu0 %v567
        %756 = vmatprep.subr.bf16.mxu0 %v564
        %757 = vmatpush1.bf16.msra.mxu0 %v563
        %758 = vmatprep.subr.bf16.mxu0 %v560
        %759 = vmatpush1.bf16.msra.mxu0 %v559
        %760 = vmatprep.subr.bf16.mxu0 %v620
        %761 = vmatpush2.bf16.msra.mxu0 %v619
        %762 = vmatprep.subr.bf16.mxu0 %v616
        %763 = vmatpush2.bf16.msra.mxu0 %v615
        %764 = vmatprep.subr.bf16.mxu0 %v612
        %765 = vmatpush2.bf16.msra.mxu0 %v611
        %766 = vmatprep.subr.bf16.mxu0 %v608
        %767 = vmatpush2.bf16.msra.mxu0 %v607
        %768 = vmatprep.subr.bf16.mxu0 %v604
        %769 = vmatpush2.bf16.msra.mxu0 %v603
        %770 = vmatprep.subr.bf16.mxu0 %v600
        %771 = vmatpush2.bf16.msra.mxu0 %v599
        %772 = vmatprep.subr.bf16.mxu0 %v596
        %773 = vmatpush2.bf16.msra.mxu0 %v595
        %774 = vmatprep.subr.bf16.mxu0 %v592
        %775 = vmatpush2.bf16.msra.mxu0 %v591
        %776 = vmatprep.mubr.bf16.mxu0 %v236
        %777 = vmatmul.mubr.bf16.gmra.mxu0 %v235
        %v778 = vpop.f32.mrf.mxu0
        %v779 = vadd.f32 %v738, %v778
        %v780 = vpop.f32.mrf.mxu0
        %v781 = vadd.f32 %v740, %v780
        %v782 = vpop.f32.mrf.mxu0
        %v783 = vpop.f32.mrf.mxu0
        %784 = vdwg.mxu0
        %v785 = vadd.f32 %v225, %v697
        %v786 = vadd.f32 %v226, %v699
        %v787 = vadd.f32 %v227, %v779
        %v788 = vadd.f32 %v228, %v781
        %789 = vst [vmem:[#allocation2] sm:$0xff] %v785
        %790 = vst [vmem:[#allocation2 + $0x8] sm:$0xff] %v786
        %791 = vst [vmem:[#allocation2 + $0x10] sm:$0xff] %v787
        %792 = vst [vmem:[#allocation2 + $0x18] sm:$0xff] %v788
        // Predicated region
        $region41: #{tpu_custom_call.1} parent=27 // pred_check
          %p793 = pneg %p217
        $region42: #{tpu_custom_call.1} parent=27 // pred_check_branch
          %795 = sbr.rel (%p793) target = $region44
        $region43: #{tpu_custom_call.1} parent=27 // pred_region
          %v796 = vld [vmem:[#allocation2] sm:$0xff]
          %v797 = vld [vmem:[#allocation2 + $0x8] sm:$0xff]
          %v798 = vld [vmem:[#allocation2 + $0x10] sm:$0xff]
          %v799 = vld [vmem:[#allocation2 + $0x18] sm:$0xff]
          %v800 = vpack.c.bf16 %v796, %v796
          %v801 = vpack.c.bf16 %v797, %v797
          %v802 = vpack.c.bf16 %v798, %v798
          %v803 = vpack.c.bf16 %v799, %v799
          %v808 = vunpack.c.l.b16 %v800
          %v809 = vunpack.c.l.b16 %v801
          %v810 = vunpack.c.l.b16 %v802
          %v811 = vunpack.c.l.b16 %v803
          %v812 = vpack.c.b16 %v809, %v808
          %v813 = vpack.c.b16 %v811, %v810
          %816 = vst [vmem:[%s212] sm:$0xff] %v812
          %817 = vst [vmem:[%s212 + $0x8] sm:$0xff] %v813
        $region44: #{tpu_custom_call.1} parent=27 // pred_fallthru
          _
        %s818 = sand.u32 %s105, 1
        %s819 = scalar_lea.sflag [#allocation5], %s818
        %s820 = sand.u32 %s105, 1
        %s821 = smul.addr %s820, 16
        %s822 = scalar_lea.vmem [#allocation8], %s821
        // Predicated region
        $region45: #{tpu_custom_call.1} parent=27 // pred_check
          %p823 = pneg %p115
        $region46: #{tpu_custom_call.1} parent=27 // pred_check_branch
          %825 = sbr.rel (%p823) target = $region48
        $region47: #{tpu_custom_call.1} parent=27 // pred_region
          %s826 = smul.u32 4, %s26
          %s828 = ssub.s32 256, 256
          %829 = vsyncadd %s819, %s828
          %s830 = smul.addr %s25, 16
          %s831 = sadd.s32 %s826, %s830
          %s832 = smul.addr %s831, 64
          %s833 = scalar_lea.hbm %s2, %s832
          %s835 = sshll.u32 %s822, 4
          %s836 = int_to_ptr.vmem [resolvable:$true] %s835
          %838 = dma.vmem_to_hbm [thread:$0]  %s836, 256, %s833, %s819
        $region48: #{tpu_custom_call.1} parent=27 // pred_fallthru
          _
      $region28: #{tpu_custom_call.1} parent=5 // pred_fallthru
        _
      %p839 = scmp.le.s32.totalorder 2, %s15
      // Predicated region
      $region49: #{tpu_custom_call.1} parent=5 // pred_check
        %p840 = pneg %p839
      $region50: #{tpu_custom_call.1} parent=5 // pred_check_branch
        %842 = sbr.rel (%p840) target = $region52
      $region51: #{tpu_custom_call.1} parent=5 // pred_region
        %s843 = ssub.s32 %s15, 2
        // Predicated region
        $region53: #{tpu_custom_call.1} parent=51 // pred_check
          %p844 = pneg %p121
        $region54: #{tpu_custom_call.1} parent=51 // pred_check_branch
          %846 = sbr.rel (%p844) target = $region56
        $region55: #{tpu_custom_call.1} parent=51 // pred_region
          %s847 = sand.u32 %s106, 1
          %s848 = scalar_lea.sflag [#allocation5], %s847
          %s849 = sand.u32 %s106, 1
          %s850 = smul.addr %s849, 16
          %s851 = scalar_lea.vmem [#allocation8], %s850
          %852 = dma.done %s848, 256
        $region56: #{tpu_custom_call.1} parent=51 // pred_fallthru
          _
      $region52: #{tpu_custom_call.1} parent=5 // pred_fallthru
        _
    $region6: #{tpu_custom_call.1} parent=1 // loop_footer
      %s19 = sadd.s32 1, %s15
    $region7: #{tpu_custom_call.1} parent=1 // loop_footer_branch
      %14 = sbr.rel target = $region3
    $region8: #{tpu_custom_call.1} parent=1 // loop_exit
      _
    %853 = vsyncpa [#allocation4], 1
    %s854 = scalar_lea.sflag [#allocation4], 1
    %855 = vsyncpa %s854, 1
    %856 = vsyncpa [#allocation7], 1
    %s857 = scalar_lea.sflag [#allocation7], 1
    %858 = vsyncpa %s857, 1
    %859 = vsyncpa [#allocation5], 1
    %s860 = scalar_lea.sflag [#allocation5], 1
    %861 = vsyncpa %s860, 1

</llo_original>
